<compile_context>
chip_gen: v6e
topology: v6e:2x2x1
jax: 0.10.0
libtpu: 0.0.40
codegen_flags: <defaults>
</compile_context>

<pallas_src>
import functools

import jax
import jax.numpy as jnp
from jax import lax
from jax.experimental import pallas as pl
from jax.experimental.pallas import tpu as pltpu


# ---------------------------------------------------------------------------
# Fused MiniCLIP forward kernel
# ---------------------------------------------------------------------------
def _fused_miniclip_kernel(*refs, img_relu, txt_relu, scale, use_bf16):
    """refs = (x, y, img_w0, img_b0, ..., txt_w0, txt_b0, ..., logits_ref, loss_ref)."""
    n_img = len(img_relu)
    n_txt = len(txt_relu)

    x_ref, y_ref = refs[0], refs[1]
    img_refs = refs[2:2 + 2 * n_img]
    txt_refs = refs[2 + 2 * n_img:2 + 2 * n_img + 2 * n_txt]
    logits_ref, loss_ref = refs[-2], refs[-1]

    def maybe_bf16(v):
        return v.astype(jnp.bfloat16) if use_bf16 else v

    def mlp(h, wrefs, relu_flags):
        # Unrolled at trace time; every Linear is one MXU dot, activations stay
        # vreg/VMEM resident for the whole chain.
        for li, relu in enumerate(relu_flags):
            w = wrefs[2 * li][...]
            b = wrefs[2 * li + 1][...]          # (1, out) -> broadcasts over batch
            h = jnp.dot(maybe_bf16(h), maybe_bf16(w),
                        preferred_element_type=jnp.float32) + b
            if relu:
                h = jnp.maximum(h, 0.0)
        return h

    i_f = mlp(x_ref[...], img_refs, img_relu)
    t_f = mlp(y_ref[...], txt_refs, txt_relu)

    # L2-normalize (torch.nn.functional.normalize, p=2, eps=1e-12):
    #   v / max(||v||, eps)  ==  v * rsqrt(max(sum(v*v), eps^2))
    eps = 1e-12
    i_e = i_f * lax.rsqrt(jnp.maximum(jnp.sum(i_f * i_f, axis=1, keepdims=True),
                                      eps * eps))
    t_e = t_f * lax.rsqrt(jnp.maximum(jnp.sum(t_f * t_f, axis=1, keepdims=True),
                                      eps * eps))

    # logits = (i_e @ t_e.T) * scale, contracting the shared feature axis directly
    # (no explicit transpose / XLU work).
    logits = lax.dot_general(
        maybe_bf16(i_e), maybe_bf16(t_e),
        dimension_numbers=(((1,), (1,)), ((), ())),
        preferred_element_type=jnp.float32) * jnp.float32(scale)
    logits_ref[...] = logits

    B = logits.shape[0]

    # CLIP loss without materializing log_softmax matrices:
    #   loss = -(sum(diag(logits)) - 0.5*(sum(lse_rows) + sum(lse_cols))) / B
    mx1 = jnp.max(logits, axis=1, keepdims=True)
    lse1 = mx1 + jnp.log(jnp.sum(jnp.exp(logits - mx1), axis=1, keepdims=True))
    mx0 = jnp.max(logits, axis=0, keepdims=True)
    lse0 = mx0 + jnp.log(jnp.sum(jnp.exp(logits - mx0), axis=0, keepdims=True))

    rows = lax.broadcasted_iota(jnp.int32, (B, B), 0)
    cols = lax.broadcasted_iota(jnp.int32, (B, B), 1)
    s_diag = jnp.sum(jnp.where(rows == cols, logits, 0.0))

    loss = -(s_diag - 0.5 * (jnp.sum(lse1) + jnp.sum(lse0))) / B
    loss_ref[0, 0] = loss


def miniclip_forward(x, y, img_params, txt_params, scale=100.0,
                     use_bf16_matmul=False):
    """Single fused pallas_call for the whole MiniCLIP forward."""
    B = x.shape[0]
    img_relu = tuple(bool(r) for _, _, r in img_params)
    txt_relu = tuple(bool(r) for _, _, r in txt_params)

    flat_params = []
    for w, b, _ in img_params:
        flat_params += [w, b]
    for w, b, _ in txt_params:
        flat_params += [w, b]

    kernel = functools.partial(
        _fused_miniclip_kernel,
        img_relu=img_relu, txt_relu=txt_relu,
        scale=float(scale), use_bf16=use_bf16_matmul)

    n_inputs = 2 + len(flat_params)
    logits, loss = pl.pallas_call(
        kernel,
        out_shape=(
            jax.ShapeDtypeStruct((B, B), jnp.float32),
            jax.ShapeDtypeStruct((1, 1), jnp.float32),
        ),
        in_specs=[pl.BlockSpec(memory_space=pltpu.MemorySpace.VMEM)] * n_inputs,
        out_specs=(
            pl.BlockSpec(memory_space=pltpu.MemorySpace.VMEM),
            pl.BlockSpec(memory_space=pltpu.MemorySpace.SMEM),
        ),
    )(x, y, *flat_params)
    return loss[0, 0], logits


# ---------------------------------------------------------------------------
# Parameter init (PyTorch nn.Linear-style uniform) — plain JAX host code
# ---------------------------------------------------------------------------
def init_mlp_params(key, in_features, hidden_size, n_layers, out_features):
    """Returns [(W (in,out), b (1,out), relu_flag)] matching MLP.forward."""
    layer_dims = []
    if n_layers > 0:
        layer_dims.append((in_features, hidden_size, True))
        for _ in range(n_layers - 1):
            layer_dims.append((hidden_size, hidden_size, True))
        layer_dims.append((hidden_size, out_features, False))
    else:
        layer_dims.append((in_features, out_features, False))

    params = []
    for fin, fout, relu in layer_dims:
        key, kw, kb = jax.random.split(key, 3)
        bound = 1.0 / float(fin) ** 0.5
        w = jax.random.uniform(kw, (fin, fout), jnp.float32, -bound, bound)
        b = jax.random.uniform(kb, (1, fout), jnp.float32, -bound, bound)
        params.append((w, b, relu))
    return params


# ---------------------------------------------------------------------------
# Pure-JAX reference for sanity checking
# ---------------------------------------------------------------------------
def _reference(x, y, img_params, txt_params, scale=100.0):
    def mlp(h, params):
        for w, b, relu in params:
            h = h @ w + b
            if relu:
                h = jnp.maximum(h, 0.0)
        return h

    def norm(v):
        n = jnp.sqrt(jnp.sum(v * v, axis=1, keepdims=True))
        return v / jnp.maximum(n, 1e-12)

    i_e = norm(mlp(x, img_params))
    t_e = norm(mlp(y, txt_params))
    logits = i_e @ t_e.T * scale
    cx = jax.nn.log_softmax(logits, axis=1)
    cy = jax.nn.log_softmax(logits, axis=0)
    loss = -jnp.mean(0.5 * jnp.diagonal(cx) + 0.5 * jnp.diagonal(cy))
    return loss, logits


if __name__ == "__main__":
    key = jax.random.PRNGKey(0)
    kx, ky, kimg, ktxt = jax.random.split(key, 4)

    # MiniCLIP(in_features_img=32, hidden_size_img=16, n_layers_img=2,
    #          in_features_txt=24, hidden_size_txt=16, n_layers_txt=1,
    #          out_features=16, loss='clip')
    B = 8
    in_img, hid_img, nl_img = 32, 16, 2
    in_txt, hid_txt, nl_txt = 24, 16, 1
    out_features = 16

    x = jax.random.normal(kx, (B, in_img), jnp.float32)
    y = jax.random.normal(ky, (B, in_txt), jnp.float32)

    img_params = init_mlp_params(kimg, in_img, hid_img, nl_img, out_features)
    txt_params = init_mlp_params(ktxt, in_txt, hid_txt, nl_txt, out_features)

    loss, logits = miniclip_forward(x, y, img_params, txt_params)
    jax.block_until_ready((loss, logits))

    ref_loss, ref_logits = _reference(x, y, img_params, txt_params)
    assert jnp.allclose(logits, ref_logits, atol=1e-3, rtol=1e-3), (
        "logits mismatch", float(jnp.max(jnp.abs(logits - ref_logits))))
    assert jnp.allclose(loss, ref_loss, atol=1e-3, rtol=1e-3), (
        "loss mismatch", float(loss), float(ref_loss))

    print("KERNEL_OK")
</pallas_src>

<mosaic_0001>
module attributes {stable_mosaic.version = 11 : i64} {
  func.func @_fused_miniclip_kernel(%arg0: memref<8x32xf32, #tpu.memory_space<vmem>>, %arg1: memref<8x24xf32, #tpu.memory_space<vmem>>, %arg2: memref<32x16xf32, #tpu.memory_space<vmem>>, %arg3: memref<1x16xf32, #tpu.memory_space<vmem>>, %arg4: memref<16x16xf32, #tpu.memory_space<vmem>>, %arg5: memref<1x16xf32, #tpu.memory_space<vmem>>, %arg6: memref<16x16xf32, #tpu.memory_space<vmem>>, %arg7: memref<1x16xf32, #tpu.memory_space<vmem>>, %arg8: memref<24x16xf32, #tpu.memory_space<vmem>>, %arg9: memref<1x16xf32, #tpu.memory_space<vmem>>, %arg10: memref<16x16xf32, #tpu.memory_space<vmem>>, %arg11: memref<1x16xf32, #tpu.memory_space<vmem>>, %arg12: memref<8x8xf32, #tpu.memory_space<vmem>>, %arg13: memref<1x1xf32, #tpu.memory_space<smem>>) attributes {dimension_semantics = [], scalar_prefetch = 0 : i64, scratch_operands = 0 : i64, tpu.core_type = #tpu.core_type<tc>} {
    %c0 = arith.constant 0 : index
    %c0_0 = arith.constant 0 : index
    %0 = vector.load %arg0[%c0, %c0_0] : memref<8x32xf32, #tpu.memory_space<vmem>>, vector<8x32xf32>
    %c0_1 = arith.constant 0 : index
    %c0_2 = arith.constant 0 : index
    %1 = vector.load %arg2[%c0_1, %c0_2] : memref<32x16xf32, #tpu.memory_space<vmem>>, vector<32x16xf32>
    %c0_3 = arith.constant 0 : index
    %c0_4 = arith.constant 0 : index
    %2 = vector.load %arg3[%c0_3, %c0_4] : memref<1x16xf32, #tpu.memory_space<vmem>>, vector<1x16xf32>
    %cst = arith.constant dense<0.000000e+00> : vector<8x16xf32>
    %3 = tpu.matmul %0, %1, %cst {dimension_numbers = #tpu.dot_dimension_numbers<[1], [0], [0], [1], [0, 0, 1, 1], [], []>} : vector<8x32xf32>, vector<32x16xf32>, vector<8x16xf32> -> vector<8x16xf32>
    %4 = vector.broadcast %2 : vector<1x16xf32> to vector<8x16xf32>
    %5 = arith.addf %3, %4 : vector<8x16xf32>
    %cst_5 = arith.constant 0.000000e+00 : f32
    %6 = vector.broadcast %cst_5 : f32 to vector<8x16xf32>
    %7 = arith.maximumf %5, %6 : vector<8x16xf32>
    %c0_6 = arith.constant 0 : index
    %c0_7 = arith.constant 0 : index
    %8 = vector.load %arg4[%c0_6, %c0_7] : memref<16x16xf32, #tpu.memory_space<vmem>>, vector<16x16xf32>
    %c0_8 = arith.constant 0 : index
    %c0_9 = arith.constant 0 : index
    %9 = vector.load %arg5[%c0_8, %c0_9] : memref<1x16xf32, #tpu.memory_space<vmem>>, vector<1x16xf32>
    %cst_10 = arith.constant dense<0.000000e+00> : vector<8x16xf32>
    %10 = tpu.matmul %7, %8, %cst_10 {dimension_numbers = #tpu.dot_dimension_numbers<[1], [0], [0], [1], [0, 0, 1, 1], [], []>} : vector<8x16xf32>, vector<16x16xf32>, vector<8x16xf32> -> vector<8x16xf32>
    %11 = vector.broadcast %9 : vector<1x16xf32> to vector<8x16xf32>
    %12 = arith.addf %10, %11 : vector<8x16xf32>
    %cst_11 = arith.constant 0.000000e+00 : f32
    %13 = vector.broadcast %cst_11 : f32 to vector<8x16xf32>
    %14 = arith.maximumf %12, %13 : vector<8x16xf32>
    %c0_12 = arith.constant 0 : index
    %c0_13 = arith.constant 0 : index
    %15 = vector.load %arg6[%c0_12, %c0_13] : memref<16x16xf32, #tpu.memory_space<vmem>>, vector<16x16xf32>
    %c0_14 = arith.constant 0 : index
    %c0_15 = arith.constant 0 : index
    %16 = vector.load %arg7[%c0_14, %c0_15] : memref<1x16xf32, #tpu.memory_space<vmem>>, vector<1x16xf32>
    %cst_16 = arith.constant dense<0.000000e+00> : vector<8x16xf32>
    %17 = tpu.matmul %14, %15, %cst_16 {dimension_numbers = #tpu.dot_dimension_numbers<[1], [0], [0], [1], [0, 0, 1, 1], [], []>} : vector<8x16xf32>, vector<16x16xf32>, vector<8x16xf32> -> vector<8x16xf32>
    %18 = vector.broadcast %16 : vector<1x16xf32> to vector<8x16xf32>
    %19 = arith.addf %17, %18 : vector<8x16xf32>
    %c0_17 = arith.constant 0 : index
    %c0_18 = arith.constant 0 : index
    %20 = vector.load %arg1[%c0_17, %c0_18] : memref<8x24xf32, #tpu.memory_space<vmem>>, vector<8x24xf32>
    %c0_19 = arith.constant 0 : index
    %c0_20 = arith.constant 0 : index
    %21 = vector.load %arg8[%c0_19, %c0_20] : memref<24x16xf32, #tpu.memory_space<vmem>>, vector<24x16xf32>
    %c0_21 = arith.constant 0 : index
    %c0_22 = arith.constant 0 : index
    %22 = vector.load %arg9[%c0_21, %c0_22] : memref<1x16xf32, #tpu.memory_space<vmem>>, vector<1x16xf32>
    %cst_23 = arith.constant dense<0.000000e+00> : vector<8x16xf32>
    %23 = tpu.matmul %20, %21, %cst_23 {dimension_numbers = #tpu.dot_dimension_numbers<[1], [0], [0], [1], [0, 0, 1, 1], [], []>} : vector<8x24xf32>, vector<24x16xf32>, vector<8x16xf32> -> vector<8x16xf32>
    %24 = vector.broadcast %22 : vector<1x16xf32> to vector<8x16xf32>
    %25 = arith.addf %23, %24 : vector<8x16xf32>
    %cst_24 = arith.constant 0.000000e+00 : f32
    %26 = vector.broadcast %cst_24 : f32 to vector<8x16xf32>
    %27 = arith.maximumf %25, %26 : vector<8x16xf32>
    %c0_25 = arith.constant 0 : index
    %c0_26 = arith.constant 0 : index
    %28 = vector.load %arg10[%c0_25, %c0_26] : memref<16x16xf32, #tpu.memory_space<vmem>>, vector<16x16xf32>
    %c0_27 = arith.constant 0 : index
    %c0_28 = arith.constant 0 : index
    %29 = vector.load %arg11[%c0_27, %c0_28] : memref<1x16xf32, #tpu.memory_space<vmem>>, vector<1x16xf32>
    %cst_29 = arith.constant dense<0.000000e+00> : vector<8x16xf32>
    %30 = tpu.matmul %27, %28, %cst_29 {dimension_numbers = #tpu.dot_dimension_numbers<[1], [0], [0], [1], [0, 0, 1, 1], [], []>} : vector<8x16xf32>, vector<16x16xf32>, vector<8x16xf32> -> vector<8x16xf32>
    %31 = vector.broadcast %29 : vector<1x16xf32> to vector<8x16xf32>
    %32 = arith.addf %30, %31 : vector<8x16xf32>
    %33 = arith.mulf %19, %19 : vector<8x16xf32>
    %cst_30 = arith.constant dense<0.000000e+00> : vector<8xf32>
    %34 = vector.multi_reduction <add>, %33, %cst_30 [1] : vector<8x16xf32> to vector<8xf32>
    %35 = vector.shape_cast %34 : vector<8xf32> to vector<8x1xf32>
    %cst_31 = arith.constant 1.000000e-24 : f32
    %36 = vector.broadcast %cst_31 : f32 to vector<8x1xf32>
    %37 = arith.maximumf %35, %36 : vector<8x1xf32>
    %38 = math.rsqrt %37 : vector<8x1xf32>
    %39 = vector.broadcast %38 : vector<8x1xf32> to vector<8x16xf32>
    %40 = arith.mulf %19, %39 : vector<8x16xf32>
    %41 = arith.mulf %32, %32 : vector<8x16xf32>
    %cst_32 = arith.constant dense<0.000000e+00> : vector<8xf32>
    %42 = vector.multi_reduction <add>, %41, %cst_32 [1] : vector<8x16xf32> to vector<8xf32>
    %43 = vector.shape_cast %42 : vector<8xf32> to vector<8x1xf32>
    %cst_33 = arith.constant 1.000000e-24 : f32
    %44 = vector.broadcast %cst_33 : f32 to vector<8x1xf32>
    %45 = arith.maximumf %43, %44 : vector<8x1xf32>
    %46 = math.rsqrt %45 : vector<8x1xf32>
    %47 = vector.broadcast %46 : vector<8x1xf32> to vector<8x16xf32>
    %48 = arith.mulf %32, %47 : vector<8x16xf32>
    %cst_34 = arith.constant dense<0.000000e+00> : vector<8x8xf32>
    %49 = tpu.matmul %40, %48, %cst_34 {dimension_numbers = #tpu.dot_dimension_numbers<[1], [1], [0], [0], [0, 0, 1, 0], [], []>} : vector<8x16xf32>, vector<8x16xf32>, vector<8x8xf32> -> vector<8x8xf32>
    %cst_35 = arith.constant 1.000000e+02 : f32
    %50 = vector.broadcast %cst_35 : f32 to vector<8x8xf32>
    %51 = arith.mulf %49, %50 : vector<8x8xf32>
    %c0_36 = arith.constant 0 : index
    %c0_37 = arith.constant 0 : index
    %52 = vector.load %arg12[%c0_36, %c0_37] : memref<8x8xf32, #tpu.memory_space<vmem>>, vector<8x8xf32>
    tpu.vector_store %arg12[%c0_36, %c0_37], %51 {strides = array<i32>} : memref<8x8xf32, #tpu.memory_space<vmem>>, vector<8x8xf32>,
    %cst_38 = arith.constant dense<0xFF800000> : vector<8xf32>
    %53 = vector.multi_reduction <maximumf>, %51, %cst_38 [1] : vector<8x8xf32> to vector<8xf32>
    %54 = vector.shape_cast %53 : vector<8xf32> to vector<8x1xf32>
    %55 = vector.broadcast %54 : vector<8x1xf32> to vector<8x8xf32>
    %56 = arith.subf %51, %55 : vector<8x8xf32>
    %57 = math.exp %56 : vector<8x8xf32>
    %cst_39 = arith.constant dense<0.000000e+00> : vector<8xf32>
    %58 = vector.multi_reduction <add>, %57, %cst_39 [1] : vector<8x8xf32> to vector<8xf32>
    %59 = vector.shape_cast %58 : vector<8xf32> to vector<8x1xf32>
    %60 = math.log %59 : vector<8x1xf32>
    %61 = arith.addf %54, %60 : vector<8x1xf32>
    %cst_40 = arith.constant dense<0xFF800000> : vector<8xf32>
    %62 = vector.multi_reduction <maximumf>, %51, %cst_40 [0] : vector<8x8xf32> to vector<8xf32>
    %63 = vector.shape_cast %62 : vector<8xf32> to vector<1x8xf32>
    %64 = vector.broadcast %63 : vector<1x8xf32> to vector<8x8xf32>
    %65 = arith.subf %51, %64 : vector<8x8xf32>
    %66 = math.exp %65 : vector<8x8xf32>
    %cst_41 = arith.constant dense<0.000000e+00> : vector<8xf32>
    %67 = vector.multi_reduction <add>, %66, %cst_41 [0] : vector<8x8xf32> to vector<8xf32>
    %68 = vector.shape_cast %67 : vector<8xf32> to vector<1x8xf32>
    %69 = math.log %68 : vector<1x8xf32>
    %70 = arith.addf %63, %69 : vector<1x8xf32>
    %71 = tpu.iota {dimensions = array<i32: 0>} : vector<8x8xi32>
    %72 = tpu.iota {dimensions = array<i32: 1>} : vector<8x8xi32>
    %73 = arith.cmpi eq, %71, %72 : vector<8x8xi32>
    %cst_42 = arith.constant 0.000000e+00 : f32
    %74 = vector.broadcast %cst_42 : f32 to vector<8x8xf32>
    %75 = arith.select %73, %51, %74 : vector<8x8xi1>, vector<8x8xf32>
    %76 = vector.shape_cast %75 : vector<8x8xf32> to vector<1x8x8xf32>
    %cst_43 = arith.constant dense<0.000000e+00> : vector<1xf32>
    %77 = vector.multi_reduction <add>, %76, %cst_43 [1, 2] : vector<1x8x8xf32> to vector<1xf32>
    %78 = vector.shape_cast %77 : vector<1xf32> to vector<1x1x1xf32>
    %79 = vector.extract %78[0, 0, 0] : f32 from vector<1x1x1xf32>
    %80 = vector.shape_cast %61 : vector<8x1xf32> to vector<1x8x1xf32>
    %cst_44 = arith.constant dense<0.000000e+00> : vector<1xf32>
    %81 = vector.multi_reduction <add>, %80, %cst_44 [1, 2] : vector<1x8x1xf32> to vector<1xf32>
    %82 = vector.shape_cast %81 : vector<1xf32> to vector<1x1x1xf32>
    %83 = vector.extract %82[0, 0, 0] : f32 from vector<1x1x1xf32>
    %84 = vector.shape_cast %70 : vector<1x8xf32> to vector<1x1x8xf32>
    %cst_45 = arith.constant dense<0.000000e+00> : vector<1xf32>
    %85 = vector.multi_reduction <add>, %84, %cst_45 [1, 2] : vector<1x1x8xf32> to vector<1xf32>
    %86 = vector.shape_cast %85 : vector<1xf32> to vector<1x1x1xf32>
    %87 = vector.extract %86[0, 0, 0] : f32 from vector<1x1x1xf32>
    %88 = arith.addf %83, %87 : f32
    %cst_46 = arith.constant 5.000000e-01 : f32
    %89 = arith.mulf %cst_46, %88 : f32
    %90 = arith.subf %79, %89 : f32
    %cst_47 = arith.constant 0.000000e+00 : f32
    %91 = arith.subf %cst_47, %90 : f32
    %cst_48 = arith.constant 8.000000e+00 : f32
    %92 = arith.divf %91, %cst_48 : f32
    %c0_49 = arith.constant 0 : index
    %c0_50 = arith.constant 0 : index
    %93 = memref.load %arg13[%c0_49, %c0_50] : memref<1x1xf32, #tpu.memory_space<smem>>
    memref.store %92, %arg13[%c0_49, %c0_50] : memref<1x1xf32, #tpu.memory_space<smem>>
    return
  }
}

</mosaic_0001>

<llo_original>
// kernel: tpu_custom_call.1
$region0: #{tpu_custom_call.1}
  #allocation0 [shape = 'u32[]', space=smem, size = 0x4, offset = 0x4, fixed_abs, tag = 'smem constant byte address 0x4 - core index']
  #allocation1 [shape = 'u32[144,128]{1,0:T(1,128)}', space=vmem, size = 0x12000, scoped, tag = 'internal scratch']
  %s0 = inlined_call_operand.vmem [shape: f32[8,32], index: 0, kind: input, shape index: {}]
  %s1 = inlined_call_operand.vmem [shape: f32[8,24], index: 1, kind: input, shape index: {}]
  %s2 = inlined_call_operand.vmem [shape: f32[32,16], index: 2, kind: input, shape index: {}]
  %s3 = inlined_call_operand.vmem [shape: f32[1,16], index: 3, kind: input, shape index: {}]
  %s4 = inlined_call_operand.vmem [shape: f32[16,16], index: 4, kind: input, shape index: {}]
  %s5 = inlined_call_operand.vmem [shape: f32[1,16], index: 5, kind: input, shape index: {}]
  %s6 = inlined_call_operand.vmem [shape: f32[16,16], index: 6, kind: input, shape index: {}]
  %s7 = inlined_call_operand.vmem [shape: f32[1,16], index: 7, kind: input, shape index: {}]
  %s8 = inlined_call_operand.vmem [shape: f32[24,16], index: 8, kind: input, shape index: {}]
  %s9 = inlined_call_operand.vmem [shape: f32[1,16], index: 9, kind: input, shape index: {}]
  %s10 = inlined_call_operand.vmem [shape: f32[16,16], index: 10, kind: input, shape index: {}]
  %s11 = inlined_call_operand.vmem [shape: f32[1,16], index: 11, kind: input, shape index: {}]
  %s12 = inlined_call_operand.hbm [shape: f32[8,8], index: 12, kind: output, shape index: {0}]
  %s13 = inlined_call_operand.hbm [shape: f32[1,1], index: 13, kind: output, shape index: {1}]
  %14 = xla_tuple %s12, %s13
  %s15 = sld [smem:[#allocation0]]
  $region66: #{tpu_custom_call.1} parent=0
    _
  %s17 = ssub.s32 1, %s15
  %s18 = scalar_select 0, %s17, %s15
  $region1: #{tpu_custom_call.1} parent=0
    #allocation2 [shape = 'u8[4096]{0}', space=vmem, size = 0x1000, scoped, tag = 'output window, operand 0, single buffered']
    #allocation3 [shape = 's32[1]{0}', space=sflag, size = 0x4, scoped, tag = 'scoped memory for tpu_custom_call.1']
    #allocation4 [shape = 's32[1]{0}', space=sflag, size = 0x4, scoped, tag = 'scoped memory for tpu_custom_call.1']
    #allocation5 [shape = 'u8[512]{0}', space=smem, size = 0x200, scoped, tag = 'output window, operand 1, single buffered']
    %19 = vsyncpa [#allocation3], 0
    %20 = vsyncpa [#allocation4], 0
    // Predicated region
    $region2: #{tpu_custom_call.1} parent=1 // pred_check
      _
    $region3: #{tpu_custom_call.1} parent=1 // pred_check_branch
      %22 = sbr.rel (0) target = $region5
    $region4: #{tpu_custom_call.1} parent=1 // pred_region
      _
    $region5: #{tpu_custom_call.1} parent=1 // pred_fallthru
      _
    // Predicated region
    $region6: #{tpu_custom_call.1} parent=1 // pred_check
      _
    $region7: #{tpu_custom_call.1} parent=1 // pred_check_branch
      %24 = sbr.rel (0) target = $region9
    $region8: #{tpu_custom_call.1} parent=1 // pred_region
      _
    $region9: #{tpu_custom_call.1} parent=1 // pred_fallthru
      _
    // Predicated region
    $region10: #{tpu_custom_call.1} parent=1 // pred_check
      _
    $region11: #{tpu_custom_call.1} parent=1 // pred_check_branch
      %26 = sbr.rel (0) target = $region13
    $region12: #{tpu_custom_call.1} parent=1 // pred_region
      _
    $region13: #{tpu_custom_call.1} parent=1 // pred_fallthru
      _
    // Predicated region
    $region14: #{tpu_custom_call.1} parent=1 // pred_check
      _
    $region15: #{tpu_custom_call.1} parent=1 // pred_check_branch
      %28 = sbr.rel (0) target = $region17
    $region16: #{tpu_custom_call.1} parent=1 // pred_region
      _
    $region17: #{tpu_custom_call.1} parent=1 // pred_fallthru
      _
    // Predicated region
    $region18: #{tpu_custom_call.1} parent=1 // pred_check
      _
    $region19: #{tpu_custom_call.1} parent=1 // pred_check_branch
      %30 = sbr.rel (0) target = $region21
    $region20: #{tpu_custom_call.1} parent=1 // pred_region
      _
    $region21: #{tpu_custom_call.1} parent=1 // pred_fallthru
      _
    // Predicated region
    $region22: #{tpu_custom_call.1} parent=1 // pred_check
      _
    $region23: #{tpu_custom_call.1} parent=1 // pred_check_branch
      %32 = sbr.rel (0) target = $region25
    $region24: #{tpu_custom_call.1} parent=1 // pred_region
      _
    $region25: #{tpu_custom_call.1} parent=1 // pred_fallthru
      _
    // Predicated region
    $region26: #{tpu_custom_call.1} parent=1 // pred_check
      _
    $region27: #{tpu_custom_call.1} parent=1 // pred_check_branch
      %34 = sbr.rel (0) target = $region29
    $region28: #{tpu_custom_call.1} parent=1 // pred_region
      _
    $region29: #{tpu_custom_call.1} parent=1 // pred_fallthru
      _
    // Predicated region
    $region30: #{tpu_custom_call.1} parent=1 // pred_check
      _
    $region31: #{tpu_custom_call.1} parent=1 // pred_check_branch
      %36 = sbr.rel (0) target = $region33
    $region32: #{tpu_custom_call.1} parent=1 // pred_region
      _
    $region33: #{tpu_custom_call.1} parent=1 // pred_fallthru
      _
    // Predicated region
    $region34: #{tpu_custom_call.1} parent=1 // pred_check
      _
    $region35: #{tpu_custom_call.1} parent=1 // pred_check_branch
      %38 = sbr.rel (0) target = $region37
    $region36: #{tpu_custom_call.1} parent=1 // pred_region
      _
    $region37: #{tpu_custom_call.1} parent=1 // pred_fallthru
      _
    // Predicated region
    $region38: #{tpu_custom_call.1} parent=1 // pred_check
      _
    $region39: #{tpu_custom_call.1} parent=1 // pred_check_branch
      %40 = sbr.rel (0) target = $region41
    $region40: #{tpu_custom_call.1} parent=1 // pred_region
      _
    $region41: #{tpu_custom_call.1} parent=1 // pred_fallthru
      _
    // Predicated region
    $region42: #{tpu_custom_call.1} parent=1 // pred_check
      _
    $region43: #{tpu_custom_call.1} parent=1 // pred_check_branch
      %42 = sbr.rel (0) target = $region45
    $region44: #{tpu_custom_call.1} parent=1 // pred_region
      _
    $region45: #{tpu_custom_call.1} parent=1 // pred_fallthru
      _
    // Predicated region
    $region46: #{tpu_custom_call.1} parent=1 // pred_check
      _
    $region47: #{tpu_custom_call.1} parent=1 // pred_check_branch
      %44 = sbr.rel (0) target = $region49
    $region48: #{tpu_custom_call.1} parent=1 // pred_region
      _
    $region49: #{tpu_custom_call.1} parent=1 // pred_fallthru
      _
    %v45 = vld [vmem:[%s0] sm:$0xff]
    %v46 = vld [vmem:[%s2] sm:$0xff]
    %v47 = vld [vmem:[%s2 + $0x8] sm:$0xff]
    %v48 = vld [vmem:[%s2 + $0x10] sm:$0xff]
    %v49 = vld [vmem:[%s2 + $0x18] sm:$0xff]
    %v50 = vld [vmem:[%s3] sm:$0x1]
    %v52 = vlaneseq
    %v53 = vshrl.u32 %v52, 7
    %v54 = vsub.s32 0, %v53
    %v55 = vrot.slane %v50, %v54
    %vm57 = vcmask 261120
    %v59 = vsel %vm57, %v45, 0
    %61 = vmatprep.subr.mxu0 0.0
    %62 = vmatpush1.msra.mxu0 0.0
    %63 = vmatprep.subr.mxu0 0.0
    %64 = vmatpush1.msra.mxu0 0.0
    %65 = vmatprep.subr.mxu0 0.0
    %66 = vmatpush1.msra.mxu0 0.0
    %67 = vmatprep.subr.mxu0 0.0
    %68 = vmatpush1.msra.mxu0 0.0
    %69 = vmatprep.subr.mxu0 0.0
    %70 = vmatpush1.msra.mxu0 0.0
    %71 = vmatprep.subr.mxu0 0.0
    %72 = vmatpush1.msra.mxu0 0.0
    %73 = vmatprep.subr.mxu0 0.0
    %74 = vmatpush1.msra.mxu0 0.0
    %75 = vmatprep.subr.mxu0 0.0
    %76 = vmatpush1.msra.mxu0 0.0
    %77 = vmatprep.subr.mxu0 0.0
    %78 = vmatpush1.msra.mxu0 0.0
    %79 = vmatprep.subr.mxu0 0.0
    %80 = vmatpush1.msra.mxu0 0.0
    %81 = vmatprep.subr.mxu0 0.0
    %82 = vmatpush1.msra.mxu0 0.0
    %83 = vmatprep.subr.mxu0 0.0
    %84 = vmatpush1.msra.mxu0 0.0
    %85 = vmatprep.subr.mxu0 0.0
    %86 = vmatpush1.msra.mxu0 %v49
    %87 = vmatprep.subr.mxu0 0.0
    %88 = vmatpush1.msra.mxu0 %v48
    %89 = vmatprep.subr.mxu0 0.0
    %90 = vmatpush1.msra.mxu0 %v47
    %91 = vmatprep.subr.mxu0 0.0
    %92 = vmatpush1.msra.mxu0 %v46
    %93 = vmatprep.subr.mxu0 0.0
    %94 = vmatpush2.msra.mxu0 0.0
    %95 = vmatprep.subr.mxu0 0.0
    %96 = vmatpush2.msra.mxu0 0.0
    %97 = vmatprep.subr.mxu0 0.0
    %98 = vmatpush2.msra.mxu0 0.0
    %99 = vmatprep.subr.mxu0 0.0
    %100 = vmatpush2.msra.mxu0 0.0
    %101 = vmatprep.subr.mxu0 0.0
    %102 = vmatpush2.msra.mxu0 0.0
    %103 = vmatprep.subr.mxu0 0.0
    %104 = vmatpush2.msra.mxu0 0.0
    %105 = vmatprep.subr.mxu0 0.0
    %106 = vmatpush2.msra.mxu0 0.0
    %107 = vmatprep.subr.mxu0 0.0
    %108 = vmatpush2.msra.mxu0 0.0
    %109 = vmatprep.subr.mxu0 0.0
    %110 = vmatpush2.msra.mxu0 0.0
    %111 = vmatprep.subr.mxu0 0.0
    %112 = vmatpush2.msra.mxu0 0.0
    %113 = vmatprep.subr.mxu0 0.0
    %114 = vmatpush2.msra.mxu0 0.0
    %115 = vmatprep.subr.mxu0 0.0
    %116 = vmatpush2.msra.mxu0 0.0
    %117 = vmatprep.subr.mxu0 0.0
    %118 = vmatpush2.msra.mxu0 0.0
    %119 = vmatprep.subr.mxu0 0.0
    %120 = vmatpush2.msra.mxu0 0.0
    %121 = vmatprep.subr.mxu0 0.0
    %122 = vmatpush2.msra.mxu0 0.0
    %123 = vmatprep.subr.mxu0 0.0
    %124 = vmatpush2.msra.mxu0 0.0
    %125 = vmatprep.mubr.f32.mxu0 0.0
    %126 = vmatmul.mubr.f32.gmra.mxu0 %v59
    %v127 = vpop.f32.mrf.mxu0
    %v128 = vadd.f32 %v55, %v127
    %v129 = vpop.f32.mrf.mxu0
    %130 = vdwg.mxu0
    %v131 = vmax.f32 %v128, 0.0
    %v132 = vld [vmem:[%s4] sm:$0xff]
    %v133 = vld [vmem:[%s4 + $0x8] sm:$0xff]
    %v134 = vld [vmem:[%s5] sm:$0x1]
    %v136 = vlaneseq
    %v137 = vshrl.u32 %v136, 7
    %v138 = vsub.s32 0, %v137
    %v139 = vrot.slane %v134, %v138
    %vm141 = vcmask 130048
    %v143 = vsel %vm141, %v131, 0
    %145 = vmatprep.subr.mxu0 0.0
    %146 = vmatpush1.msra.mxu0 0.0
    %147 = vmatprep.subr.mxu0 0.0
    %148 = vmatpush1.msra.mxu0 0.0
    %149 = vmatprep.subr.mxu0 0.0
    %150 = vmatpush1.msra.mxu0 0.0
    %151 = vmatprep.subr.mxu0 0.0
    %152 = vmatpush1.msra.mxu0 0.0
    %153 = vmatprep.subr.mxu0 0.0
    %154 = vmatpush1.msra.mxu0 0.0
    %155 = vmatprep.subr.mxu0 0.0
    %156 = vmatpush1.msra.mxu0 0.0
    %157 = vmatprep.subr.mxu0 0.0
    %158 = vmatpush1.msra.mxu0 0.0
    %159 = vmatprep.subr.mxu0 0.0
    %160 = vmatpush1.msra.mxu0 0.0
    %161 = vmatprep.subr.mxu0 0.0
    %162 = vmatpush1.msra.mxu0 0.0
    %163 = vmatprep.subr.mxu0 0.0
    %164 = vmatpush1.msra.mxu0 0.0
    %165 = vmatprep.subr.mxu0 0.0
    %166 = vmatpush1.msra.mxu0 0.0
    %167 = vmatprep.subr.mxu0 0.0
    %168 = vmatpush1.msra.mxu0 0.0
    %169 = vmatprep.subr.mxu0 0.0
    %170 = vmatpush1.msra.mxu0 0.0
    %171 = vmatprep.subr.mxu0 0.0
    %172 = vmatpush1.msra.mxu0 0.0
    %173 = vmatprep.subr.mxu0 0.0
    %174 = vmatpush1.msra.mxu0 %v133
    %175 = vmatprep.subr.mxu0 0.0
    %176 = vmatpush1.msra.mxu0 %v132
    %177 = vmatprep.subr.mxu0 0.0
    %178 = vmatpush2.msra.mxu0 0.0
    %179 = vmatprep.subr.mxu0 0.0
    %180 = vmatpush2.msra.mxu0 0.0
    %181 = vmatprep.subr.mxu0 0.0
    %182 = vmatpush2.msra.mxu0 0.0
    %183 = vmatprep.subr.mxu0 0.0
    %184 = vmatpush2.msra.mxu0 0.0
    %185 = vmatprep.subr.mxu0 0.0
    %186 = vmatpush2.msra.mxu0 0.0
    %187 = vmatprep.subr.mxu0 0.0
    %188 = vmatpush2.msra.mxu0 0.0
    %189 = vmatprep.subr.mxu0 0.0
    %190 = vmatpush2.msra.mxu0 0.0
    %191 = vmatprep.subr.mxu0 0.0
    %192 = vmatpush2.msra.mxu0 0.0
    %193 = vmatprep.subr.mxu0 0.0
    %194 = vmatpush2.msra.mxu0 0.0
    %195 = vmatprep.subr.mxu0 0.0
    %196 = vmatpush2.msra.mxu0 0.0
    %197 = vmatprep.subr.mxu0 0.0
    %198 = vmatpush2.msra.mxu0 0.0
    %199 = vmatprep.subr.mxu0 0.0
    %200 = vmatpush2.msra.mxu0 0.0
    %201 = vmatprep.subr.mxu0 0.0
    %202 = vmatpush2.msra.mxu0 0.0
    %203 = vmatprep.subr.mxu0 0.0
    %204 = vmatpush2.msra.mxu0 0.0
    %205 = vmatprep.subr.mxu0 0.0
    %206 = vmatpush2.msra.mxu0 0.0
    %207 = vmatprep.subr.mxu0 0.0
    %208 = vmatpush2.msra.mxu0 0.0
    %209 = vmatprep.mubr.f32.mxu0 0.0
    %210 = vmatmul.mubr.f32.gmra.mxu0 %v143
    %v211 = vpop.f32.mrf.mxu0
    %v212 = vadd.f32 %v139, %v211
    %v213 = vpop.f32.mrf.mxu0
    %214 = vdwg.mxu0
    %v215 = vmax.f32 %v212, 0.0
    %v216 = vld [vmem:[%s6] sm:$0xff]
    %v217 = vld [vmem:[%s6 + $0x8] sm:$0xff]
    %v218 = vld [vmem:[%s7] sm:$0x1]
    %v220 = vlaneseq
    %v221 = vshrl.u32 %v220, 7
    %v222 = vsub.s32 0, %v221
    %v223 = vrot.slane %v218, %v222
    %v226 = vsel %vm141, %v215, 0
    %228 = vmatprep.subr.mxu0 0.0
    %229 = vmatpush1.msra.mxu0 0.0
    %230 = vmatprep.subr.mxu0 0.0
    %231 = vmatpush1.msra.mxu0 0.0
    %232 = vmatprep.subr.mxu0 0.0
    %233 = vmatpush1.msra.mxu0 0.0
    %234 = vmatprep.subr.mxu0 0.0
    %235 = vmatpush1.msra.mxu0 0.0
    %236 = vmatprep.subr.mxu0 0.0
    %237 = vmatpush1.msra.mxu0 0.0
    %238 = vmatprep.subr.mxu0 0.0
    %239 = vmatpush1.msra.mxu0 0.0
    %240 = vmatprep.subr.mxu0 0.0
    %241 = vmatpush1.msra.mxu0 0.0
    %242 = vmatprep.subr.mxu0 0.0
    %243 = vmatpush1.msra.mxu0 0.0
    %244 = vmatprep.subr.mxu0 0.0
    %245 = vmatpush1.msra.mxu0 0.0
    %246 = vmatprep.subr.mxu0 0.0
    %247 = vmatpush1.msra.mxu0 0.0
    %248 = vmatprep.subr.mxu0 0.0
    %249 = vmatpush1.msra.mxu0 0.0
    %250 = vmatprep.subr.mxu0 0.0
    %251 = vmatpush1.msra.mxu0 0.0
    %252 = vmatprep.subr.mxu0 0.0
    %253 = vmatpush1.msra.mxu0 0.0
    %254 = vmatprep.subr.mxu0 0.0
    %255 = vmatpush1.msra.mxu0 0.0
    %256 = vmatprep.subr.mxu0 0.0
    %257 = vmatpush1.msra.mxu0 %v217
    %258 = vmatprep.subr.mxu0 0.0
    %259 = vmatpush1.msra.mxu0 %v216
    %260 = vmatprep.subr.mxu0 0.0
    %261 = vmatpush2.msra.mxu0 0.0
    %262 = vmatprep.subr.mxu0 0.0
    %263 = vmatpush2.msra.mxu0 0.0
    %264 = vmatprep.subr.mxu0 0.0
    %265 = vmatpush2.msra.mxu0 0.0
    %266 = vmatprep.subr.mxu0 0.0
    %267 = vmatpush2.msra.mxu0 0.0
    %268 = vmatprep.subr.mxu0 0.0
    %269 = vmatpush2.msra.mxu0 0.0
    %270 = vmatprep.subr.mxu0 0.0
    %271 = vmatpush2.msra.mxu0 0.0
    %272 = vmatprep.subr.mxu0 0.0
    %273 = vmatpush2.msra.mxu0 0.0
    %274 = vmatprep.subr.mxu0 0.0
    %275 = vmatpush2.msra.mxu0 0.0
    %276 = vmatprep.subr.mxu0 0.0
    %277 = vmatpush2.msra.mxu0 0.0
    %278 = vmatprep.subr.mxu0 0.0
    %279 = vmatpush2.msra.mxu0 0.0
    %280 = vmatprep.subr.mxu0 0.0
    %281 = vmatpush2.msra.mxu0 0.0
    %282 = vmatprep.subr.mxu0 0.0
    %283 = vmatpush2.msra.mxu0 0.0
    %284 = vmatprep.subr.mxu0 0.0
    %285 = vmatpush2.msra.mxu0 0.0
    %286 = vmatprep.subr.mxu0 0.0
    %287 = vmatpush2.msra.mxu0 0.0
    %288 = vmatprep.subr.mxu0 0.0
    %289 = vmatpush2.msra.mxu0 0.0
    %290 = vmatprep.subr.mxu0 0.0
    %291 = vmatpush2.msra.mxu0 0.0
    %292 = vmatprep.mubr.f32.mxu0 0.0
    %293 = vmatmul.mubr.f32.gmra.mxu0 %v226
    %v294 = vpop.f32.mrf.mxu0
    %v295 = vadd.f32 %v223, %v294
    %v296 = vpop.f32.mrf.mxu0
    %297 = vdwg.mxu0
    %v298 = vld [vmem:[%s1] sm:$0xff]
    %v299 = vld [vmem:[%s8] sm:$0xff]
    %v300 = vld [vmem:[%s8 + $0x8] sm:$0xff]
    %v301 = vld [vmem:[%s8 + $0x10] sm:$0xff]
    %v302 = vld [vmem:[%s9] sm:$0x1]
    %v304 = vlaneseq
    %v305 = vshrl.u32 %v304, 7
    %v306 = vsub.s32 0, %v305
    %v307 = vrot.slane %v302, %v306
    %vm309 = vcmask 195584
    %v311 = vsel %vm309, %v298, 0
    %313 = vmatprep.subr.mxu0 0.0
    %314 = vmatpush1.msra.mxu0 0.0
    %315 = vmatprep.subr.mxu0 0.0
    %316 = vmatpush1.msra.mxu0 0.0
    %317 = vmatprep.subr.mxu0 0.0
    %318 = vmatpush1.msra.mxu0 0.0
    %319 = vmatprep.subr.mxu0 0.0
    %320 = vmatpush1.msra.mxu0 0.0
    %321 = vmatprep.subr.mxu0 0.0
    %322 = vmatpush1.msra.mxu0 0.0
    %323 = vmatprep.subr.mxu0 0.0
    %324 = vmatpush1.msra.mxu0 0.0
    %325 = vmatprep.subr.mxu0 0.0
    %326 = vmatpush1.msra.mxu0 0.0
    %327 = vmatprep.subr.mxu0 0.0
    %328 = vmatpush1.msra.mxu0 0.0
    %329 = vmatprep.subr.mxu0 0.0
    %330 = vmatpush1.msra.mxu0 0.0
    %331 = vmatprep.subr.mxu0 0.0
    %332 = vmatpush1.msra.mxu0 0.0
    %333 = vmatprep.subr.mxu0 0.0
    %334 = vmatpush1.msra.mxu0 0.0
    %335 = vmatprep.subr.mxu0 0.0
    %336 = vmatpush1.msra.mxu0 0.0
    %337 = vmatprep.subr.mxu0 0.0
    %338 = vmatpush1.msra.mxu0 0.0
    %339 = vmatprep.subr.mxu0 0.0
    %340 = vmatpush1.msra.mxu0 %v301
    %341 = vmatprep.subr.mxu0 0.0
    %342 = vmatpush1.msra.mxu0 %v300
    %343 = vmatprep.subr.mxu0 0.0
    %344 = vmatpush1.msra.mxu0 %v299
    %345 = vmatprep.subr.mxu0 0.0
    %346 = vmatpush2.msra.mxu0 0.0
    %347 = vmatprep.subr.mxu0 0.0
    %348 = vmatpush2.msra.mxu0 0.0
    %349 = vmatprep.subr.mxu0 0.0
    %350 = vmatpush2.msra.mxu0 0.0
    %351 = vmatprep.subr.mxu0 0.0
    %352 = vmatpush2.msra.mxu0 0.0
    %353 = vmatprep.subr.mxu0 0.0
    %354 = vmatpush2.msra.mxu0 0.0
    %355 = vmatprep.subr.mxu0 0.0
    %356 = vmatpush2.msra.mxu0 0.0
    %357 = vmatprep.subr.mxu0 0.0
    %358 = vmatpush2.msra.mxu0 0.0
    %359 = vmatprep.subr.mxu0 0.0
    %360 = vmatpush2.msra.mxu0 0.0
    %361 = vmatprep.subr.mxu0 0.0
    %362 = vmatpush2.msra.mxu0 0.0
    %363 = vmatprep.subr.mxu0 0.0
    %364 = vmatpush2.msra.mxu0 0.0
    %365 = vmatprep.subr.mxu0 0.0
    %366 = vmatpush2.msra.mxu0 0.0
    %367 = vmatprep.subr.mxu0 0.0
    %368 = vmatpush2.msra.mxu0 0.0
    %369 = vmatprep.subr.mxu0 0.0
    %370 = vmatpush2.msra.mxu0 0.0
    %371 = vmatprep.subr.mxu0 0.0
    %372 = vmatpush2.msra.mxu0 0.0
    %373 = vmatprep.subr.mxu0 0.0
    %374 = vmatpush2.msra.mxu0 0.0
    %375 = vmatprep.subr.mxu0 0.0
    %376 = vmatpush2.msra.mxu0 0.0
    %377 = vmatprep.mubr.f32.mxu0 0.0
    %378 = vmatmul.mubr.f32.gmra.mxu0 %v311
    %v379 = vpop.f32.mrf.mxu0
    %v380 = vadd.f32 %v307, %v379
    %v381 = vpop.f32.mrf.mxu0
    %382 = vdwg.mxu0
    %v383 = vmax.f32 %v380, 0.0
    %v384 = vld [vmem:[%s10] sm:$0xff]
    %v385 = vld [vmem:[%s10 + $0x8] sm:$0xff]
    %v386 = vld [vmem:[%s11] sm:$0x1]
    %v388 = vlaneseq
    %v389 = vshrl.u32 %v388, 7
    %v390 = vsub.s32 0, %v389
    %v391 = vrot.slane %v386, %v390
    %v394 = vsel %vm141, %v383, 0
    %396 = vmatprep.subr.mxu0 0.0
    %397 = vmatpush1.msra.mxu0 0.0
    %398 = vmatprep.subr.mxu0 0.0
    %399 = vmatpush1.msra.mxu0 0.0
    %400 = vmatprep.subr.mxu0 0.0
    %401 = vmatpush1.msra.mxu0 0.0
    %402 = vmatprep.subr.mxu0 0.0
    %403 = vmatpush1.msra.mxu0 0.0
    %404 = vmatprep.subr.mxu0 0.0
    %405 = vmatpush1.msra.mxu0 0.0
    %406 = vmatprep.subr.mxu0 0.0
    %407 = vmatpush1.msra.mxu0 0.0
    %408 = vmatprep.subr.mxu0 0.0
    %409 = vmatpush1.msra.mxu0 0.0
    %410 = vmatprep.subr.mxu0 0.0
    %411 = vmatpush1.msra.mxu0 0.0
    %412 = vmatprep.subr.mxu0 0.0
    %413 = vmatpush1.msra.mxu0 0.0
    %414 = vmatprep.subr.mxu0 0.0
    %415 = vmatpush1.msra.mxu0 0.0
    %416 = vmatprep.subr.mxu0 0.0
    %417 = vmatpush1.msra.mxu0 0.0
    %418 = vmatprep.subr.mxu0 0.0
    %419 = vmatpush1.msra.mxu0 0.0
    %420 = vmatprep.subr.mxu0 0.0
    %421 = vmatpush1.msra.mxu0 0.0
    %422 = vmatprep.subr.mxu0 0.0
    %423 = vmatpush1.msra.mxu0 0.0
    %424 = vmatprep.subr.mxu0 0.0
    %425 = vmatpush1.msra.mxu0 %v385
    %426 = vmatprep.subr.mxu0 0.0
    %427 = vmatpush1.msra.mxu0 %v384
    %428 = vmatprep.subr.mxu0 0.0
    %429 = vmatpush2.msra.mxu0 0.0
    %430 = vmatprep.subr.mxu0 0.0
    %431 = vmatpush2.msra.mxu0 0.0
    %432 = vmatprep.subr.mxu0 0.0
    %433 = vmatpush2.msra.mxu0 0.0
    %434 = vmatprep.subr.mxu0 0.0
    %435 = vmatpush2.msra.mxu0 0.0
    %436 = vmatprep.subr.mxu0 0.0
    %437 = vmatpush2.msra.mxu0 0.0
    %438 = vmatprep.subr.mxu0 0.0
    %439 = vmatpush2.msra.mxu0 0.0
    %440 = vmatprep.subr.mxu0 0.0
    %441 = vmatpush2.msra.mxu0 0.0
    %442 = vmatprep.subr.mxu0 0.0
    %443 = vmatpush2.msra.mxu0 0.0
    %444 = vmatprep.subr.mxu0 0.0
    %445 = vmatpush2.msra.mxu0 0.0
    %446 = vmatprep.subr.mxu0 0.0
    %447 = vmatpush2.msra.mxu0 0.0
    %448 = vmatprep.subr.mxu0 0.0
    %449 = vmatpush2.msra.mxu0 0.0
    %450 = vmatprep.subr.mxu0 0.0
    %451 = vmatpush2.msra.mxu0 0.0
    %452 = vmatprep.subr.mxu0 0.0
    %453 = vmatpush2.msra.mxu0 0.0
    %454 = vmatprep.subr.mxu0 0.0
    %455 = vmatpush2.msra.mxu0 0.0
    %456 = vmatprep.subr.mxu0 0.0
    %457 = vmatpush2.msra.mxu0 0.0
    %458 = vmatprep.subr.mxu0 0.0
    %459 = vmatpush2.msra.mxu0 0.0
    %460 = vmatprep.mubr.f32.mxu0 0.0
    %461 = vmatmul.mubr.f32.gmra.mxu0 %v394
    %v462 = vpop.f32.mrf.mxu0
    %v463 = vadd.f32 %v391, %v462
    %v464 = vpop.f32.mrf.mxu0
    %465 = vdwg.mxu0
    %v466 = vmul.f32 %v295, %v295
    %v467 = vsel %vm141, %v466, 0.0
    %468 = vadd.xlane.f32.xlu0 %v467
    %v469 = vpop.xlane.xlu0 %468
    %v470 = vmax.f32 %v469, 1e-24
    %v471 = vrsqrt.pop %v470
    %v472 = vmul.f32 %v295, %v471
    %v473 = vmul.f32 %v463, %v463
    %v474 = vsel %vm141, %v473, 0.0
    %475 = vadd.xlane.f32.xlu0 %v474
    %v476 = vpop.xlane.xlu0 %475
    %v477 = vmax.f32 %v476, 1e-24
    %v478 = vrsqrt.pop %v477
    %v479 = vmul.f32 %v463, %v478
    %v481 = vsel %vm141, %v472, 0
    %v484 = vsel %vm141, %v479, 0
    %486 = vmatprep.subr.mxu0 0.0
    %487 = vmatpush1.xpose.msra.mxu0 0.0
    %488 = vmatprep.subr.mxu0 0.0
    %489 = vmatpush1.xpose.msra.mxu0 0.0
    %490 = vmatprep.subr.mxu0 0.0
    %491 = vmatpush1.xpose.msra.mxu0 0.0
    %492 = vmatprep.subr.mxu0 0.0
    %493 = vmatpush1.xpose.msra.mxu0 0.0
    %494 = vmatprep.subr.mxu0 0.0
    %495 = vmatpush1.xpose.msra.mxu0 0.0
    %496 = vmatprep.subr.mxu0 0.0
    %497 = vmatpush1.xpose.msra.mxu0 0.0
    %498 = vmatprep.subr.mxu0 0.0
    %499 = vmatpush1.xpose.msra.mxu0 0.0
    %500 = vmatprep.subr.mxu0 0.0
    %501 = vmatpush1.xpose.msra.mxu0 0.0
    %502 = vmatprep.subr.mxu0 0.0
    %503 = vmatpush1.xpose.msra.mxu0 0.0
    %504 = vmatprep.subr.mxu0 0.0
    %505 = vmatpush1.xpose.msra.mxu0 0.0
    %506 = vmatprep.subr.mxu0 0.0
    %507 = vmatpush1.xpose.msra.mxu0 0.0
    %508 = vmatprep.subr.mxu0 0.0
    %509 = vmatpush1.xpose.msra.mxu0 0.0
    %510 = vmatprep.subr.mxu0 0.0
    %511 = vmatpush1.xpose.msra.mxu0 0.0
    %512 = vmatprep.subr.mxu0 0.0
    %513 = vmatpush1.xpose.msra.mxu0 0.0
    %514 = vmatprep.subr.mxu0 0.0
    %515 = vmatpush1.xpose.msra.mxu0 0.0
    %516 = vmatprep.subr.mxu0 0.0
    %517 = vmatpush1.xpose.msra.mxu0 %v484
    %518 = vmatprep.subr.mxu0 0.0
    %519 = vmatpush2.xpose.msra.mxu0 0.0
    %520 = vmatprep.subr.mxu0 0.0
    %521 = vmatpush2.xpose.msra.mxu0 0.0
    %522 = vmatprep.subr.mxu0 0.0
    %523 = vmatpush2.xpose.msra.mxu0 0.0
    %524 = vmatprep.subr.mxu0 0.0
    %525 = vmatpush2.xpose.msra.mxu0 0.0
    %526 = vmatprep.subr.mxu0 0.0
    %527 = vmatpush2.xpose.msra.mxu0 0.0
    %528 = vmatprep.subr.mxu0 0.0
    %529 = vmatpush2.xpose.msra.mxu0 0.0
    %530 = vmatprep.subr.mxu0 0.0
    %531 = vmatpush2.xpose.msra.mxu0 0.0
    %532 = vmatprep.subr.mxu0 0.0
    %533 = vmatpush2.xpose.msra.mxu0 0.0
    %534 = vmatprep.subr.mxu0 0.0
    %535 = vmatpush2.xpose.msra.mxu0 0.0
    %536 = vmatprep.subr.mxu0 0.0
    %537 = vmatpush2.xpose.msra.mxu0 0.0
    %538 = vmatprep.subr.mxu0 0.0
    %539 = vmatpush2.xpose.msra.mxu0 0.0
    %540 = vmatprep.subr.mxu0 0.0
    %541 = vmatpush2.xpose.msra.mxu0 0.0
    %542 = vmatprep.subr.mxu0 0.0
    %543 = vmatpush2.xpose.msra.mxu0 0.0
    %544 = vmatprep.subr.mxu0 0.0
    %545 = vmatpush2.xpose.msra.mxu0 0.0
    %546 = vmatprep.subr.mxu0 0.0
    %547 = vmatpush2.xpose.msra.mxu0 0.0
    %548 = vmatprep.subr.mxu0 0.0
    %549 = vmatpush2.xpose.msra.mxu0 0.0
    %550 = vmatprep.mubr.f32.mxu0 0.0
    %551 = vmatmul.mubr.f32.gmra.mxu0 %v481
    %v552 = vpop.f32.mrf.mxu0
    %v553 = vadd.f32 0.0, %v552
    %v554 = vpop.f32.mrf.mxu0
    %555 = vdwg.mxu0
    %v556 = vmul.f32 %v553, 100.0
    %vm557 = vcmask 64512
    %558 = vst.msk [vmem:[#allocation2] sm:$0xff] %vm557, %v556
    %v559 = vsel %vm557, %v556, -inf
    %560 = vmax.xlane.f32.xlu0 %v559
    %v561 = vpop.xlane.xlu0 %560
    %v562 = vsub.f32 %v556, %v561
    %v563 = vmul.f32 %v562, 1.442695
    %v564 = vpow.pop %v563
    %v565 = vsel %vm557, %v564, 0.0
    %566 = vadd.xlane.f32.xlu0 %v565
    %v567 = vpop.xlane.xlu0 %566
    %v568 = vlog2.pop %v567
    %v569 = vmul.f32 %v568, 0.6931472
    %v570 = vadd.f32 %v561, %v569
    %v571 = vrot.slane %v559, 4
    %v572 = vmax.f32 %v559, %v571
    %v573 = vrot.slane %v572, 2
    %v574 = vmax.f32 %v572, %v573
    %v575 = vrot.slane %v574, 1
    %v576 = vmax.f32 %v574, %v575
    %v577 = vsub.f32 %v556, %v576
    %v578 = vmul.f32 %v577, 1.442695
    %v579 = vpow.pop %v578
    %v580 = vsel %vm557, %v579, 0.0
    %v581 = vrot.slane %v580, 4
    %v582 = vadd.f32 %v580, %v581
    %v583 = vrot.slane %v582, 2
    %v584 = vadd.f32 %v582, %v583
    %v585 = vrot.slane %v584, 1
    %v586 = vadd.f32 %v584, %v585
    %v587 = vlog2.pop %v586
    %v588 = vmul.f32 %v587, 0.6931472
    %v589 = vadd.f32 %v576, %v588
    %v590 = vlaneseq
    %v591 = vshrl.u32 %v590, 7
    %v592 = vlaneseq
    %v593 = vand.u32 %v592, 127
    %vm594 = vcmp.eq.s32.totalorder %v591, %v593
    %v595 = vsel %vm594, %v556, 0.0
    %v596 = vsel %vm557, %v595, 0.0
    %597 = vadd.xlane.f32.xlu0 %v596
    %v598 = vpop.xlane.xlu0 %597
    %v599 = vrot.slane %v598, 4
    %v600 = vadd.f32 %v598, %v599
    %v601 = vrot.slane %v600, 2
    %v602 = vadd.f32 %v600, %v601
    %v603 = vrot.slane %v602, 1
    %v604 = vadd.f32 %v602, %v603
    %s605 = vtos %v604
    %vm606 = vcmask 7168
    %v607 = vsel %vm606, %v570, 0.0
    %608 = vadd.xlane.f32.xlu0 %v607
    %v609 = vpop.xlane.xlu0 %608
    %v610 = vrot.slane %v609, 4
    %v611 = vadd.f32 %v609, %v610
    %v612 = vrot.slane %v611, 2
    %v613 = vadd.f32 %v611, %v612
    %v614 = vrot.slane %v613, 1
    %v615 = vadd.f32 %v613, %v614
    %s616 = vtos %v615
    %vm617 = vcmask 57344
    %v618 = vsel %vm617, %v589, 0.0
    %619 = vadd.xlane.f32.xlu0 %v618
    %v620 = vpop.xlane.xlu0 %619
    %v621 = vrot.slane %v620, 4
    %v622 = vadd.f32 %v620, %v621
    %v623 = vrot.slane %v622, 2
    %v624 = vadd.f32 %v622, %v623
    %v625 = vrot.slane %v624, 1
    %v626 = vadd.f32 %v624, %v625
    %s627 = vtos %v626
    %s628 = sadd.f32 %s616, %s627
    %s629 = smul.f32 %s628, 0.5
    %s630 = ssub.f32 %s605, %s629
    %s631 = ssub.f32 0.0, %s630
    %v632 = vrcp.pop 8.0
    %s633 = vtos %v632
    %s634 = smul.f32 %s631, %s633
    %s635 = scalar_lea.smem [#allocation5], 0
    %636 = sst [smem:[%s635]] %s634
    // Predicated region
    $region50: #{tpu_custom_call.1} parent=1 // pred_check
      _
    $region51: #{tpu_custom_call.1} parent=1 // pred_check_branch
      %638 = sbr.rel (0) target = $region53
    $region52: #{tpu_custom_call.1} parent=1 // pred_region
      %s640 = ssub.s32 128, 128
      %641 = vsyncadd [#allocation3], %s640
      %s643 = sshll.u32 [#allocation2], 4
      %s644 = int_to_ptr.vmem [resolvable:$true] %s643
      %646 = dma.vmem_to_hbm [thread:$0]  %s644, 128, %s12, [#allocation3]
    $region53: #{tpu_custom_call.1} parent=1 // pred_fallthru
      _
    // Predicated region
    $region54: #{tpu_custom_call.1} parent=1 // pred_check
      _
    $region55: #{tpu_custom_call.1} parent=1 // pred_check_branch
      %648 = sbr.rel (0) target = $region57
    $region56: #{tpu_custom_call.1} parent=1 // pred_region
      %s650 = ssub.s32 16, 16
      %651 = vsyncadd [#allocation4], %s650
      %654 = dma.smem_to_hbm [#allocation5], 16, %s13, [#allocation4]
    $region57: #{tpu_custom_call.1} parent=1 // pred_fallthru
      _
    // Predicated region
    $region58: #{tpu_custom_call.1} parent=1 // pred_check
      _
    $region59: #{tpu_custom_call.1} parent=1 // pred_check_branch
      %656 = sbr.rel (0) target = $region61
    $region60: #{tpu_custom_call.1} parent=1 // pred_region
      %657 = dma.done [#allocation3], 128
    $region61: #{tpu_custom_call.1} parent=1 // pred_fallthru
      _
    // Predicated region
    $region62: #{tpu_custom_call.1} parent=1 // pred_check
      _
    $region63: #{tpu_custom_call.1} parent=1 // pred_check_branch
      %659 = sbr.rel (0) target = $region65
    $region64: #{tpu_custom_call.1} parent=1 // pred_region
      %660 = dma.done [#allocation4], 16
    $region65: #{tpu_custom_call.1} parent=1 // pred_fallthru
      _
    %661 = sfence
    %662 = vsyncpa [#allocation3], 1
    %663 = vsyncpa [#allocation4], 1

</llo_original>
